<compile_context>
chip_gen: v5e
topology: v5e:2x2
jax: 0.10.0
libtpu: 0.0.40
codegen_flags: <defaults>
</compile_context>

<pallas_src>
import jax
import jax.numpy as jnp
from jax.experimental import pallas as pl
from jax.experimental.pallas import tpu as pltpu

NUM_CLASSES = 14   # `num_classes` is a free global in the reference code; use 14 (CheXNet-style)
BN_EPS = 1e-5      # PyTorch BatchNorm2d default eps
LANES = 128        # pad the class dim to one full lane width


def _head_kernel(x_ref, scale_ref, shift_ref, w_ref, b_ref, o_ref):
    # x_ref:     (TB, HW, C)     batch block of NHWC-flattened features (bf16 or f32)
    # scale_ref: (1, C)          folded scale = gamma * rsqrt(var + eps) / HW
    # shift_ref: (1, C)          folded shift = beta - mean * gamma * rsqrt(var + eps)
    # w_ref:     (C, LANES)      classifier weight^T, lane-padded to 128
    # b_ref:     (1, LANES)      classifier bias, lane-padded
    # o_ref:     (1, TB, LANES)  sigmoid probabilities for this batch block
    x = x_ref[...].astype(jnp.float32)              # upcast; accumulate pooling in f32

    # avg_pool2d(16) on a 16x16 map == global mean; 1/HW is folded into scale,
    # so a plain sum suffices.  axis=1 is the SUBLANE axis -> VALU adds, no XLU.
    pooled = jnp.sum(x, axis=1)                     # (TB, C)

    # Folded BatchNorm2d (inference) + ReLU; C lane-dense.
    z = jnp.maximum(pooled * scale_ref[...] + shift_ref[...], 0.0)        # (TB, C)

    # Linear(1024 -> NUM_CLASSES), lane-padded to 128 output columns (MXU).
    logits = jnp.dot(z, w_ref[...], preferred_element_type=jnp.float32) + b_ref[...]

    # Sigmoid; plain lane-dense (TB, 128) unmasked store.
    o_ref[0] = jax.nn.sigmoid(logits).astype(o_ref.dtype)


def _vmem_budget_bytes():
    # Generation-aware scoped-VMEM budget: ~3/4 of physical, capped at 96 MiB
    # (v5e/v6e have 128 MiB physical; v7x only 64 MiB -> ~48 MiB budget).
    try:
        cap = int(pltpu.get_tpu_info().vmem_capacity_bytes)
    except Exception:
        cap = 64 << 20   # conservative (v7x-sized) fallback
    return int(min((cap * 3) // 4, 96 << 20))


def _choose_tb(batch, per_sample_block_bytes, vmem_budget):
    # TB must divide B (no wrapper-side padding), fit the double-buffered VMEM
    # budget, and preferably leave >= 4 grid steps (>= 2 per v7x TensorCore).
    reserve = 8 << 20   # double-buffered weights + out/scale/shift + internal scratch
    cap = max(1, min(32, (vmem_budget - reserve) // (2 * per_sample_block_bytes)))
    divisors = [d for d in range(1, batch + 1) if batch % d == 0 and d <= cap]
    for min_steps in (4, 2, 1):
        cands = [d for d in divisors if batch // d >= min_steps]
        if cands:
            return max(cands)
    return 1


@jax.jit
def densenet121_vanilla_head(feat_nhwc, gamma, beta, running_mean, running_var, w, b):
    """feat_nhwc: (B, 16, 16, 1024) output of `self.features`, NHWC, bf16 (or f32)."""
    B, H, W_, C = feat_nhwc.shape
    # Global-mean == avg_pool2d(kernel_size=16) only because the map is exactly 16x16.
    assert H == 16 and W_ == 16, (H, W_)
    HW = H * W_
    NC = w.shape[0]                      # PyTorch Linear weight: (NUM_CLASSES, 1024)
    assert NC <= LANES

    # ---- wrapper-side, parameter-only prep (constant-folded under jit) ----
    scale = gamma.astype(jnp.float32) * jax.lax.rsqrt(running_var.astype(jnp.float32) + BN_EPS)
    shift = beta.astype(jnp.float32) - running_mean.astype(jnp.float32) * scale
    scale_pool = (scale / HW).reshape(1, C)          # 1/HW folded in: kernel sums, not means
    shift2 = shift.reshape(1, C)
    w_t = jnp.zeros((C, LANES), jnp.float32).at[:, :NC].set(w.T.astype(jnp.float32))
    b_pad = jnp.zeros((1, LANES), jnp.float32).at[:, :NC].set(b.astype(jnp.float32))

    x = feat_nhwc.reshape(B, HW, C)                  # NHWC flattened; free reshape

    # ---- generation-aware batch tiling: TB divides B, no padding ----
    vmem_budget = _vmem_budget_bytes()
    per_sample = HW * C * jnp.dtype(x.dtype).itemsize
    TB = _choose_tb(B, per_sample, vmem_budget)
    nb = B // TB

    bytes_accessed = (B * HW * C * jnp.dtype(x.dtype).itemsize
                      + (C * LANES + 2 * C + LANES) * 4 + B * LANES * 4)
    flops = B * C * HW + 4 * B * C + 2 * B * C * LANES + 2 * B * LANES
    cost = pl.CostEstimate(flops=int(flops), transcendentals=int(B * LANES),
                           bytes_accessed=int(bytes_accessed))

    # NOTE: once VMEM allows, sweeping pipeline_mode=pl.Buffered(3) on the
    # feature BlockSpec can hide DMA ramp/finish at step boundaries; left at
    # the default double-buffer here for portability.
    out = pl.pallas_call(
        _head_kernel,
        out_shape=jax.ShapeDtypeStruct((nb, TB, LANES), jnp.float32),
        grid_spec=pltpu.PrefetchScalarGridSpec(
            num_scalar_prefetch=0,
            grid=(nb,),
            in_specs=[
                pl.BlockSpec((TB, HW, C), lambda i: (i, 0, 0)),   # batch-block feature slab
                pl.BlockSpec((1, C), lambda i: (0, 0)),           # folded BN scale (incl. 1/HW)
                pl.BlockSpec((1, C), lambda i: (0, 0)),           # folded BN shift
                pl.BlockSpec((C, LANES), lambda i: (0, 0)),       # classifier W^T (lane-padded)
                pl.BlockSpec((1, LANES), lambda i: (0, 0)),       # classifier bias (lane-padded)
            ],
            out_specs=pl.BlockSpec((1, TB, LANES), lambda i: (i, 0, 0)),
        ),
        compiler_params=pltpu.CompilerParams(
            dimension_semantics=("parallel",),
            vmem_limit_bytes=vmem_budget),
        cost_estimate=cost,
    )(x, scale_pool, shift2, w_t, b_pad)

    return out.reshape(B, LANES)[:, :NC]


def _reference(feat_nhwc, gamma, beta, running_mean, running_var, w, b):
    B, H, W_, C = feat_nhwc.shape
    x = feat_nhwc.astype(jnp.float32)
    pooled = x.reshape(B, H * W_, C).mean(axis=1)                            # avg_pool2d(16)
    z = (pooled - running_mean) / jnp.sqrt(running_var + BN_EPS) * gamma + beta
    z = jnp.maximum(z, 0.0)
    return jax.nn.sigmoid(z @ w.T + b)


def _make_inputs(key, B, C, H, W):
    kx, kg, kb, km, kv, kw, kbias = jax.random.split(key, 7)
    # `self.features` output, emitted NHWC + bf16 by the producer
    # (halves the HBM DMA into the head kernel).
    feat = jax.random.normal(kx, (B, H, W, C), dtype=jnp.float32).astype(jnp.bfloat16)
    gamma = 1.0 + 0.1 * jax.random.normal(kg, (C,), dtype=jnp.float32)
    beta = 0.1 * jax.random.normal(kb, (C,), dtype=jnp.float32)
    running_mean = 0.1 * jax.random.normal(km, (C,), dtype=jnp.float32)
    running_var = jax.random.uniform(kv, (C,), dtype=jnp.float32, minval=0.5, maxval=1.5)
    w = 0.05 * jax.random.normal(kw, (NUM_CLASSES, C), dtype=jnp.float32)
    b = 0.05 * jax.random.normal(kbias, (NUM_CLASSES,), dtype=jnp.float32)
    return feat, gamma, beta, running_mean, running_var, w, b


if __name__ == "__main__":
    C, H, W = 1024, 16, 16   # implied by BatchNorm2d(1024) and avg_pool2d(kernel_size=16)

    # Primary test: B=2 -> TB=1, 2 grid steps (one per TensorCore).
    args = _make_inputs(jax.random.PRNGKey(0), 2, C, H, W)
    out = jax.block_until_ready(densenet121_vanilla_head(*args))
    ref = _reference(*args)
    assert out.shape == (2, NUM_CLASSES), out.shape
    assert jnp.allclose(out, ref, rtol=2e-4, atol=2e-4), float(jnp.max(jnp.abs(out - ref)))

    # Secondary test: B=8 -> TB=2, 4 grid steps (exercises TB>1, still no padding).
    args8 = _make_inputs(jax.random.PRNGKey(1), 8, C, H, W)
    out8 = jax.block_until_ready(densenet121_vanilla_head(*args8))
    ref8 = _reference(*args8)
    assert out8.shape == (8, NUM_CLASSES), out8.shape
    assert jnp.allclose(out8, ref8, rtol=2e-4, atol=2e-4), float(jnp.max(jnp.abs(out8 - ref8)))

    print("KERNEL_OK")
</pallas_src>

<mosaic_0001>
module attributes {stable_mosaic.version = 11 : i64} {
  func.func @_head_kernel(%arg0: i32, %arg1: memref<1x256x1024xbf16, #tpu.memory_space<vmem>>, %arg2: memref<1x1024xf32, #tpu.memory_space<vmem>>, %arg3: memref<1x1024xf32, #tpu.memory_space<vmem>>, %arg4: memref<1024x128xf32, #tpu.memory_space<vmem>>, %arg5: memref<1x128xf32, #tpu.memory_space<vmem>>, %arg6: memref<1x1x128xf32, #tpu.memory_space<vmem>>) attributes {dimension_semantics = [#tpu.dimension_semantics<parallel>], iteration_bounds = array<i64: 2>, scalar_prefetch = 0 : i64, scratch_operands = 0 : i64, tpu.core_type = #tpu.core_type<tc>, window_params = [{transform_indices = @transform_0, window_bounds = array<i64: 1, 256, 1024>}, {pipeline_mode = #tpu.pipeline_mode<synchronous>, transform_indices = @transform_1, window_bounds = array<i64: 1, 1024>}, {pipeline_mode = #tpu.pipeline_mode<synchronous>, transform_indices = @transform_2, window_bounds = array<i64: 1, 1024>}, {pipeline_mode = #tpu.pipeline_mode<synchronous>, transform_indices = @transform_3, window_bounds = array<i64: 1024, 128>}, {pipeline_mode = #tpu.pipeline_mode<synchronous>, transform_indices = @transform_4, window_bounds = array<i64: 1, 128>}, {transform_indices = @transform_5, window_bounds = array<i64: 1, 1, 128>}]} {
    %c0 = arith.constant 0 : index
    %c0_0 = arith.constant 0 : index
    %c0_1 = arith.constant 0 : index
    %0 = vector.load %arg1[%c0, %c0_0, %c0_1] : memref<1x256x1024xbf16, #tpu.memory_space<vmem>>, vector<1x256x1024xbf16>
    %1 = arith.extf %0 : vector<1x256x1024xbf16> to vector<1x256x1024xf32>
    %cst = arith.constant dense<0.000000e+00> : vector<1x1024xf32>
    %2 = vector.multi_reduction <add>, %1, %cst [1] : vector<1x256x1024xf32> to vector<1x1024xf32>
    %c0_2 = arith.constant 0 : index
    %c0_3 = arith.constant 0 : index
    %3 = vector.load %arg2[%c0_2, %c0_3] : memref<1x1024xf32, #tpu.memory_space<vmem>>, vector<1x1024xf32>
    %4 = arith.mulf %2, %3 : vector<1x1024xf32>
    %c0_4 = arith.constant 0 : index
    %c0_5 = arith.constant 0 : index
    %5 = vector.load %arg3[%c0_4, %c0_5] : memref<1x1024xf32, #tpu.memory_space<vmem>>, vector<1x1024xf32>
    %6 = arith.addf %4, %5 : vector<1x1024xf32>
    %cst_6 = arith.constant 0.000000e+00 : f32
    %7 = vector.broadcast %cst_6 : f32 to vector<1x1024xf32>
    %8 = arith.maximumf %6, %7 : vector<1x1024xf32>
    %c0_7 = arith.constant 0 : index
    %c0_8 = arith.constant 0 : index
    %9 = vector.load %arg4[%c0_7, %c0_8] : memref<1024x128xf32, #tpu.memory_space<vmem>>, vector<1024x128xf32>
    %cst_9 = arith.constant dense<0.000000e+00> : vector<1x128xf32>
    %10 = tpu.matmul %8, %9, %cst_9 {dimension_numbers = #tpu.dot_dimension_numbers<[1], [0], [0], [1], [0, 0, 1, 1], [], []>} : vector<1x1024xf32>, vector<1024x128xf32>, vector<1x128xf32> -> vector<1x128xf32>
    %c0_10 = arith.constant 0 : index
    %c0_11 = arith.constant 0 : index
    %11 = vector.load %arg5[%c0_10, %c0_11] : memref<1x128xf32, #tpu.memory_space<vmem>>, vector<1x128xf32>
    %12 = arith.addf %10, %11 : vector<1x128xf32>
    %13 = arith.negf %12 : vector<1x128xf32>
    %14 = math.exp %13 : vector<1x128xf32>
    %cst_12 = arith.constant 1.000000e+00 : f32
    %15 = vector.broadcast %cst_12 : f32 to vector<1x128xf32>
    %16 = arith.addf %15, %14 : vector<1x128xf32>
    %17 = arith.divf %15, %16 : vector<1x128xf32>
    %c0_13 = arith.constant 0 : index
    %c0_14 = arith.constant 0 : index
    %c0_15 = arith.constant 0 : index
    %18 = vector.load %arg6[%c0_13, %c0_14, %c0_15] : memref<1x1x128xf32, #tpu.memory_space<vmem>>, vector<1x1x128xf32>
    %19 = vector.shape_cast %18 : vector<1x1x128xf32> to vector<1x128xf32>
    %20 = vector.shape_cast %17 : vector<1x128xf32> to vector<1x1x128xf32>
    tpu.vector_store %arg6[%c0_13, %c0_14, %c0_15], %20 {strides = array<i32>} : memref<1x1x128xf32, #tpu.memory_space<vmem>>, vector<1x1x128xf32>,
    return
  }
  func.func @transform_0(%arg0: i32) -> (i32, i32, i32) {
    %c0_i32 = arith.constant 0 : i32
    %c0_i32_0 = arith.constant 0 : i32
    %c0_i32_1 = arith.constant 0 : i32
    return %arg0, %c0_i32, %c0_i32_0 : i32, i32, i32
  }
  func.func @transform_1(%arg0: i32) -> (i32, i32) {
    %c0_i32 = arith.constant 0 : i32
    %c0_i32_0 = arith.constant 0 : i32
    %c0_i32_1 = arith.constant 0 : i32
    return %c0_i32, %c0_i32_0 : i32, i32
  }
  func.func @transform_2(%arg0: i32) -> (i32, i32) {
    %c0_i32 = arith.constant 0 : i32
    %c0_i32_0 = arith.constant 0 : i32
    %c0_i32_1 = arith.constant 0 : i32
    return %c0_i32, %c0_i32_0 : i32, i32
  }
  func.func @transform_3(%arg0: i32) -> (i32, i32) {
    %c0_i32 = arith.constant 0 : i32
    %c0_i32_0 = arith.constant 0 : i32
    %c0_i32_1 = arith.constant 0 : i32
    return %c0_i32, %c0_i32_0 : i32, i32
  }
  func.func @transform_4(%arg0: i32) -> (i32, i32) {
    %c0_i32 = arith.constant 0 : i32
    %c0_i32_0 = arith.constant 0 : i32
    %c0_i32_1 = arith.constant 0 : i32
    return %c0_i32, %c0_i32_0 : i32, i32
  }
  func.func @transform_5(%arg0: i32) -> (i32, i32, i32) {
    %c0_i32 = arith.constant 0 : i32
    %c0_i32_0 = arith.constant 0 : i32
    %c0_i32_1 = arith.constant 0 : i32
    return %arg0, %c0_i32, %c0_i32_0 : i32, i32, i32
  }
}

</mosaic_0001>

<llo_original>
// kernel: densenet121_vanilla_head.1
$region0: #{densenet121_vanilla_head.1}
  #allocation0 [shape = 'u32[]', space=smem, size = 0x4, offset = 0x4, fixed_abs, tag = 'smem constant byte address 0x4 - core index']
  #allocation1 [shape = 'u32[72,128]{1,0:T(1,128)}', space=vmem, size = 0x9000, scoped, tag = 'internal scratch']
  %s0 = inlined_call_operand.vmem [shape: bf16[2,256,1024], index: 0, kind: input, shape index: {}]
  %s1 = inlined_call_operand.vmem [shape: f32[1,1024], index: 1, kind: input, shape index: {}]
  %s2 = inlined_call_operand.vmem [shape: f32[1,1024], index: 2, kind: input, shape index: {}]
  %s3 = inlined_call_operand.vmem [shape: f32[1024,128], index: 3, kind: input, shape index: {}]
  %s4 = inlined_call_operand.vmem [shape: f32[1,128], index: 4, kind: input, shape index: {}]
  %s5 = inlined_call_operand.hbm [shape: f32[2,1,128], index: 5, kind: output, shape index: {}]
  %s6 = sld [smem:[#allocation0]]
  $region53: #{densenet121_vanilla_head.1} parent=0
    _
  %s8 = ssub.s32 1, %s6
  %s9 = scalar_select 0, %s8, %s6
  $region1: #{densenet121_vanilla_head.1} parent=0
    #allocation2 [shape = 'u8[1024]{0}', space=vmem, size = 0x400, scoped, tag = 'output window, operand 0']
    #allocation3 [shape = 's32[2]{0}', space=sflag, size = 0x8, scoped, tag = 'scoped memory for densenet121_vanilla_head.1']
    %10 = vsyncpa [#allocation3], 0
    %s11 = scalar_lea.sflag [#allocation3], 1
    %12 = vsyncpa %s11, 0
    loop: start=0, step=1, limit=4
    $region2: #{densenet121_vanilla_head.1} parent=1 // loop_pre_header
      _
    $region3: #{densenet121_vanilla_head.1} parent=1 // loop_header
      %s14 = sphi 0, %s18
      %p15 = scmp.ge.s32.totalorder %s14, 4
      %s24 = sphi 0, %s26
      %s27 = sphi 0, %s24
      %s28 = sphi 0, %s27
      %s44 = sphi 0, %s28
      %s48 = sphi 0, %s48
      %s50 = sphi 0, %s48
      %s51 = sphi 0, %s50
      %s65 = sphi 0, %s51
      %s69 = sphi 0, %s69
      %s71 = sphi 0, %s69
      %s72 = sphi 0, %s71
      %s86 = sphi 0, %s72
      %s90 = sphi 0, %s90
      %s92 = sphi 0, %s90
      %s93 = sphi 0, %s92
      %s107 = sphi 0, %s93
      %s111 = sphi 0, %s111
      %s113 = sphi 0, %s111
      %s114 = sphi 0, %s113
      %s128 = sphi 0, %s114
      %s134 = sphi 0, %s136
      %s137 = sphi 0, %s134
      %s138 = sphi 0, %s137
      %s154 = sphi 0, %s138
    $region4: #{densenet121_vanilla_head.1} parent=1 // loop_header_branch
      %17 = sbr.rel (%p15) target = $region8
    $region5: #{densenet121_vanilla_head.1} parent=1 // loop_body
      %s19 = ssub.s32 %s14, 1
      %s20 = ssub.s32 %s14, 2
      %s21 = sadd.s32 %s14, 1
      %s22 = ssub.s32 %s14, %s21
      %p23 = scmp.eq.s32.totalorder %s22, 0
      %s25 = sadd.s32 %s24, 1
      %s26 = scalar_select %p23, %s24, %s25
      %p29 = pneg %p23
      %p30 = scmp.eq.s32.totalorder %s14, 1
      %p31 = por %p29, %p30
      %p32 = scmp.ne.s32.totalorder %s24, %s27
      %p33 = scmp.eq.s32.totalorder %s14, 0
      %p34 = por %p32, %p33
      %p35 = scmp.ne.s32.totalorder %s24, %s27
      %p36 = scmp.eq.s32.totalorder %s19, 1
      %p37 = por %p35, %p36
      %p38 = scmp.ne.s32.totalorder %s27, %s28
      %p39 = scmp.eq.s32.totalorder %s19, 0
      %p40 = por %p38, %p39
      %p41 = scmp.ne.s32.totalorder %s27, %s28
      %p42 = scmp.eq.s32.totalorder %s20, 1
      %p43 = por %p41, %p42
      %p45 = scmp.ne.s32.totalorder %s28, %s44
      %p46 = scmp.eq.s32.totalorder %s20, 0
      %p47 = por %p45, %p46
      %s49 = sadd.s32 %s48, 1
      %p52 = scmp.eq.s32.totalorder %s14, 1
      %p53 = scmp.ne.s32.totalorder %s48, %s50
      %p54 = scmp.eq.s32.totalorder %s14, 0
      %p55 = por %p53, %p54
      %p56 = scmp.ne.s32.totalorder %s48, %s50
      %p57 = scmp.eq.s32.totalorder %s19, 1
      %p58 = por %p56, %p57
      %p59 = scmp.ne.s32.totalorder %s50, %s51
      %p60 = scmp.eq.s32.totalorder %s19, 0
      %p61 = por %p59, %p60
      %p62 = scmp.ne.s32.totalorder %s50, %s51
      %p63 = scmp.eq.s32.totalorder %s20, 1
      %p64 = por %p62, %p63
      %p66 = scmp.ne.s32.totalorder %s51, %s65
      %p67 = scmp.eq.s32.totalorder %s20, 0
      %p68 = por %p66, %p67
      %s70 = sadd.s32 %s69, 1
      %p73 = scmp.eq.s32.totalorder %s14, 1
      %p74 = scmp.ne.s32.totalorder %s69, %s71
      %p75 = scmp.eq.s32.totalorder %s14, 0
      %p76 = por %p74, %p75
      %p77 = scmp.ne.s32.totalorder %s69, %s71
      %p78 = scmp.eq.s32.totalorder %s19, 1
      %p79 = por %p77, %p78
      %p80 = scmp.ne.s32.totalorder %s71, %s72
      %p81 = scmp.eq.s32.totalorder %s19, 0
      %p82 = por %p80, %p81
      %p83 = scmp.ne.s32.totalorder %s71, %s72
      %p84 = scmp.eq.s32.totalorder %s20, 1
      %p85 = por %p83, %p84
      %p87 = scmp.ne.s32.totalorder %s72, %s86
      %p88 = scmp.eq.s32.totalorder %s20, 0
      %p89 = por %p87, %p88
      %s91 = sadd.s32 %s90, 1
      %p94 = scmp.eq.s32.totalorder %s14, 1
      %p95 = scmp.ne.s32.totalorder %s90, %s92
      %p96 = scmp.eq.s32.totalorder %s14, 0
      %p97 = por %p95, %p96
      %p98 = scmp.ne.s32.totalorder %s90, %s92
      %p99 = scmp.eq.s32.totalorder %s19, 1
      %p100 = por %p98, %p99
      %p101 = scmp.ne.s32.totalorder %s92, %s93
      %p102 = scmp.eq.s32.totalorder %s19, 0
      %p103 = por %p101, %p102
      %p104 = scmp.ne.s32.totalorder %s92, %s93
      %p105 = scmp.eq.s32.totalorder %s20, 1
      %p106 = por %p104, %p105
      %p108 = scmp.ne.s32.totalorder %s93, %s107
      %p109 = scmp.eq.s32.totalorder %s20, 0
      %p110 = por %p108, %p109
      %s112 = sadd.s32 %s111, 1
      %p115 = scmp.eq.s32.totalorder %s14, 1
      %p116 = scmp.ne.s32.totalorder %s111, %s113
      %p117 = scmp.eq.s32.totalorder %s14, 0
      %p118 = por %p116, %p117
      %p119 = scmp.ne.s32.totalorder %s111, %s113
      %p120 = scmp.eq.s32.totalorder %s19, 1
      %p121 = por %p119, %p120
      %p122 = scmp.ne.s32.totalorder %s113, %s114
      %p123 = scmp.eq.s32.totalorder %s19, 0
      %p124 = por %p122, %p123
      %p125 = scmp.ne.s32.totalorder %s113, %s114
      %p126 = scmp.eq.s32.totalorder %s20, 1
      %p127 = por %p125, %p126
      %p129 = scmp.ne.s32.totalorder %s114, %s128
      %p130 = scmp.eq.s32.totalorder %s20, 0
      %p131 = por %p129, %p130
      %s132 = ssub.s32 %s14, %s21
      %p133 = scmp.eq.s32.totalorder %s132, 0
      %s135 = sadd.s32 %s134, 1
      %s136 = scalar_select %p133, %s134, %s135
      %p139 = pneg %p133
      %p140 = scmp.eq.s32.totalorder %s14, 1
      %p141 = por %p139, %p140
      %p142 = scmp.ne.s32.totalorder %s134, %s137
      %p143 = scmp.eq.s32.totalorder %s14, 0
      %p144 = por %p142, %p143
      %p145 = scmp.ne.s32.totalorder %s134, %s137
      %p146 = scmp.eq.s32.totalorder %s19, 1
      %p147 = por %p145, %p146
      %p148 = scmp.ne.s32.totalorder %s137, %s138
      %p149 = scmp.eq.s32.totalorder %s19, 0
      %p150 = por %p148, %p149
      %p151 = scmp.ne.s32.totalorder %s137, %s138
      %p152 = scmp.eq.s32.totalorder %s20, 1
      %p153 = por %p151, %p152
      %p155 = scmp.ne.s32.totalorder %s138, %s154
      %p156 = scmp.eq.s32.totalorder %s20, 0
      %p157 = por %p155, %p156
      %p158 = scmp.le.s32.totalorder 1, %s14
      %p159 = scmp.lt.s32.totalorder %s14, 3
      %p160 = pnand %p158, %p159
      %p161 = pneg %p160
      // Predicated region
      $region9: #{densenet121_vanilla_head.1} parent=5 // pred_check
        _
      $region10: #{densenet121_vanilla_head.1} parent=5 // pred_check_branch
        %163 = sbr.rel (%p160) target = $region12
      $region11: #{densenet121_vanilla_head.1} parent=5 // pred_region
        %s164 = ssub.s32 %s14, 1
        // Predicated region
        $region13: #{densenet121_vanilla_head.1} parent=11 // pred_check
          %p165 = pneg %p61
        $region14: #{densenet121_vanilla_head.1} parent=11 // pred_check_branch
          %167 = sbr.rel (%p165) target = $region16
        $region15: #{densenet121_vanilla_head.1} parent=11 // pred_region
          _
        $region16: #{densenet121_vanilla_head.1} parent=11 // pred_fallthru
          _
        // Predicated region
        $region17: #{densenet121_vanilla_head.1} parent=11 // pred_check
          %p168 = pneg %p82
        $region18: #{densenet121_vanilla_head.1} parent=11 // pred_check_branch
          %170 = sbr.rel (%p168) target = $region20
        $region19: #{densenet121_vanilla_head.1} parent=11 // pred_region
          _
        $region20: #{densenet121_vanilla_head.1} parent=11 // pred_fallthru
          _
        // Predicated region
        $region21: #{densenet121_vanilla_head.1} parent=11 // pred_check
          %p171 = pneg %p103
        $region22: #{densenet121_vanilla_head.1} parent=11 // pred_check_branch
          %173 = sbr.rel (%p171) target = $region24
        $region23: #{densenet121_vanilla_head.1} parent=11 // pred_region
          _
        $region24: #{densenet121_vanilla_head.1} parent=11 // pred_fallthru
          _
        // Predicated region
        $region25: #{densenet121_vanilla_head.1} parent=11 // pred_check
          %p174 = pneg %p124
        $region26: #{densenet121_vanilla_head.1} parent=11 // pred_check_branch
          %176 = sbr.rel (%p174) target = $region28
        $region27: #{densenet121_vanilla_head.1} parent=11 // pred_region
          _
        $region28: #{densenet121_vanilla_head.1} parent=11 // pred_fallthru
          _
      $region12: #{densenet121_vanilla_head.1} parent=5 // pred_fallthru
        _
      %p177 = scmp.lt.s32.totalorder %s14, 2
      // Predicated region
      $region29: #{densenet121_vanilla_head.1} parent=5 // pred_check
        %p178 = pneg %p177
      $region30: #{densenet121_vanilla_head.1} parent=5 // pred_check_branch
        %180 = sbr.rel (%p178) target = $region32
      $region31: #{densenet121_vanilla_head.1} parent=5 // pred_region
        // Predicated region
        $region33: #{densenet121_vanilla_head.1} parent=31 // pred_check
          %p181 = pneg %p34
        $region34: #{densenet121_vanilla_head.1} parent=31 // pred_check_branch
          %183 = sbr.rel (%p181) target = $region36
        $region35: #{densenet121_vanilla_head.1} parent=31 // pred_region
          %p184 = scmp.lt.s32.totalorder %s14, 1
          %s185 = scalar_select %p184, %s14, 1
          %s186 = smul.addr %s185, 256
          %s187 = smul.addr %s186, 4
          %s188 = scalar_lea.vmem %s0, %s187
        $region36: #{densenet121_vanilla_head.1} parent=31 // pred_fallthru
          _
      $region32: #{densenet121_vanilla_head.1} parent=5 // pred_fallthru
        _
      %p189 = scmp.le.s32.totalorder 1, %s14
      %p190 = scmp.lt.s32.totalorder %s14, 3
      %p191 = pnand %p189, %p190
      %p192 = pneg %p191
      // Predicated region
      $region37: #{densenet121_vanilla_head.1} parent=5 // pred_check
        _
      $region38: #{densenet121_vanilla_head.1} parent=5 // pred_check_branch
        %194 = sbr.rel (%p191) target = $region40
      $region39: #{densenet121_vanilla_head.1} parent=5 // pred_region
        %s195 = ssub.s32 %s14, 1
        %p196 = scmp.lt.s32.totalorder %s19, 1
        %s197 = scalar_select %p196, %s19, 1
        %s198 = smul.addr %s197, 256
        %s199 = smul.addr %s198, 4
        %s200 = scalar_lea.vmem %s0, %s199
        %p201 = pneg %p40
        %p202 = pneg %p37
        %p203 = pneg %p61
        %p204 = pneg %p58
        %p205 = pneg %p82
        %p206 = pneg %p79
        %p207 = pneg %p103
        %p208 = pneg %p100
        %p209 = pneg %p124
        %p210 = pneg %p121
        %p211 = pneg %p150
        %p212 = pneg %p147
        %s213 = sand.u32 %s137, 1
        %s214 = scalar_lea.sflag [#allocation3], %s213
        %s215 = sand.u32 %s137, 1
        %s216 = scalar_lea.vmem [#allocation2], %s215
        %p217 = scmp.lt.s32.totalorder %s19, 1
        %s218 = scalar_select %p217, %s19, 1
        %s219 = smul.addr %s218, 256
        %s220 = smul.addr %s219, 4
        %s221 = scalar_lea.vmem %s0, %s220
        %v222 = vld [vmem:[%s221] sm:$0xff]
        %v223 = vld [vmem:[%s221 + $0x8] sm:$0xff]
        %v224 = vld [vmem:[%s221 + $0x10] sm:$0xff]
        %v225 = vld [vmem:[%s221 + $0x18] sm:$0xff]
        %v226 = vld [vmem:[%s221 + $0x20] sm:$0xff]
        %v227 = vld [vmem:[%s221 + $0x28] sm:$0xff]
        %v228 = vld [vmem:[%s221 + $0x30] sm:$0xff]
        %v229 = vld [vmem:[%s221 + $0x38] sm:$0xff]
        %v230 = vld [vmem:[%s221 + $0x40] sm:$0xff]
        %v231 = vld [vmem:[%s221 + $0x48] sm:$0xff]
        %v232 = vld [vmem:[%s221 + $0x50] sm:$0xff]
        %v233 = vld [vmem:[%s221 + $0x58] sm:$0xff]
        %v234 = vld [vmem:[%s221 + $0x60] sm:$0xff]
        %v235 = vld [vmem:[%s221 + $0x68] sm:$0xff]
        %v236 = vld [vmem:[%s221 + $0x70] sm:$0xff]
        %v237 = vld [vmem:[%s221 + $0x78] sm:$0xff]
        %v238 = vld [vmem:[%s221 + $0x80] sm:$0xff]
        %v239 = vld [vmem:[%s221 + $0x88] sm:$0xff]
        %v240 = vld [vmem:[%s221 + $0x90] sm:$0xff]
        %v241 = vld [vmem:[%s221 + $0x98] sm:$0xff]
        %v242 = vld [vmem:[%s221 + $0xa0] sm:$0xff]
        %v243 = vld [vmem:[%s221 + $0xa8] sm:$0xff]
        %v244 = vld [vmem:[%s221 + $0xb0] sm:$0xff]
        %v245 = vld [vmem:[%s221 + $0xb8] sm:$0xff]
        %v246 = vld [vmem:[%s221 + $0xc0] sm:$0xff]
        %v247 = vld [vmem:[%s221 + $0xc8] sm:$0xff]
        %v248 = vld [vmem:[%s221 + $0xd0] sm:$0xff]
        %v249 = vld [vmem:[%s221 + $0xd8] sm:$0xff]
        %v250 = vld [vmem:[%s221 + $0xe0] sm:$0xff]
        %v251 = vld [vmem:[%s221 + $0xe8] sm:$0xff]
        %v252 = vld [vmem:[%s221 + $0xf0] sm:$0xff]
        %v253 = vld [vmem:[%s221 + $0xf8] sm:$0xff]
        %v254 = vld [vmem:[%s221 + $0x100] sm:$0xff]
        %v255 = vld [vmem:[%s221 + $0x108] sm:$0xff]
        %v256 = vld [vmem:[%s221 + $0x110] sm:$0xff]
        %v257 = vld [vmem:[%s221 + $0x118] sm:$0xff]
        %v258 = vld [vmem:[%s221 + $0x120] sm:$0xff]
        %v259 = vld [vmem:[%s221 + $0x128] sm:$0xff]
        %v260 = vld [vmem:[%s221 + $0x130] sm:$0xff]
        %v261 = vld [vmem:[%s221 + $0x138] sm:$0xff]
        %v262 = vld [vmem:[%s221 + $0x140] sm:$0xff]
        %v263 = vld [vmem:[%s221 + $0x148] sm:$0xff]
        %v264 = vld [vmem:[%s221 + $0x150] sm:$0xff]
        %v265 = vld [vmem:[%s221 + $0x158] sm:$0xff]
        %v266 = vld [vmem:[%s221 + $0x160] sm:$0xff]
        %v267 = vld [vmem:[%s221 + $0x168] sm:$0xff]
        %v268 = vld [vmem:[%s221 + $0x170] sm:$0xff]
        %v269 = vld [vmem:[%s221 + $0x178] sm:$0xff]
        %v270 = vld [vmem:[%s221 + $0x180] sm:$0xff]
        %v271 = vld [vmem:[%s221 + $0x188] sm:$0xff]
        %v272 = vld [vmem:[%s221 + $0x190] sm:$0xff]
        %v273 = vld [vmem:[%s221 + $0x198] sm:$0xff]
        %v274 = vld [vmem:[%s221 + $0x1a0] sm:$0xff]
        %v275 = vld [vmem:[%s221 + $0x1a8] sm:$0xff]
        %v276 = vld [vmem:[%s221 + $0x1b0] sm:$0xff]
        %v277 = vld [vmem:[%s221 + $0x1b8] sm:$0xff]
        %v278 = vld [vmem:[%s221 + $0x1c0] sm:$0xff]
        %v279 = vld [vmem:[%s221 + $0x1c8] sm:$0xff]
        %v280 = vld [vmem:[%s221 + $0x1d0] sm:$0xff]
        %v281 = vld [vmem:[%s221 + $0x1d8] sm:$0xff]
        %v282 = vld [vmem:[%s221 + $0x1e0] sm:$0xff]
        %v283 = vld [vmem:[%s221 + $0x1e8] sm:$0xff]
        %v284 = vld [vmem:[%s221 + $0x1f0] sm:$0xff]
        %v285 = vld [vmem:[%s221 + $0x1f8] sm:$0xff]
        %v286 = vld [vmem:[%s221 + $0x200] sm:$0xff]
        %v287 = vld [vmem:[%s221 + $0x208] sm:$0xff]
        %v288 = vld [vmem:[%s221 + $0x210] sm:$0xff]
        %v289 = vld [vmem:[%s221 + $0x218] sm:$0xff]
        %v290 = vld [vmem:[%s221 + $0x220] sm:$0xff]
        %v291 = vld [vmem:[%s221 + $0x228] sm:$0xff]
        %v292 = vld [vmem:[%s221 + $0x230] sm:$0xff]
        %v293 = vld [vmem:[%s221 + $0x238] sm:$0xff]
        %v294 = vld [vmem:[%s221 + $0x240] sm:$0xff]
        %v295 = vld [vmem:[%s221 + $0x248] sm:$0xff]
        %v296 = vld [vmem:[%s221 + $0x250] sm:$0xff]
        %v297 = vld [vmem:[%s221 + $0x258] sm:$0xff]
        %v298 = vld [vmem:[%s221 + $0x260] sm:$0xff]
        %v299 = vld [vmem:[%s221 + $0x268] sm:$0xff]
        %v300 = vld [vmem:[%s221 + $0x270] sm:$0xff]
        %v301 = vld [vmem:[%s221 + $0x278] sm:$0xff]
        %v302 = vld [vmem:[%s221 + $0x280] sm:$0xff]
        %v303 = vld [vmem:[%s221 + $0x288] sm:$0xff]
        %v304 = vld [vmem:[%s221 + $0x290] sm:$0xff]
        %v305 = vld [vmem:[%s221 + $0x298] sm:$0xff]
        %v306 = vld [vmem:[%s221 + $0x2a0] sm:$0xff]
        %v307 = vld [vmem:[%s221 + $0x2a8] sm:$0xff]
        %v308 = vld [vmem:[%s221 + $0x2b0] sm:$0xff]
        %v309 = vld [vmem:[%s221 + $0x2b8] sm:$0xff]
        %v310 = vld [vmem:[%s221 + $0x2c0] sm:$0xff]
        %v311 = vld [vmem:[%s221 + $0x2c8] sm:$0xff]
        %v312 = vld [vmem:[%s221 + $0x2d0] sm:$0xff]
        %v313 = vld [vmem:[%s221 + $0x2d8] sm:$0xff]
        %v314 = vld [vmem:[%s221 + $0x2e0] sm:$0xff]
        %v315 = vld [vmem:[%s221 + $0x2e8] sm:$0xff]
        %v316 = vld [vmem:[%s221 + $0x2f0] sm:$0xff]
        %v317 = vld [vmem:[%s221 + $0x2f8] sm:$0xff]
        %v318 = vld [vmem:[%s221 + $0x300] sm:$0xff]
        %v319 = vld [vmem:[%s221 + $0x308] sm:$0xff]
        %v320 = vld [vmem:[%s221 + $0x310] sm:$0xff]
        %v321 = vld [vmem:[%s221 + $0x318] sm:$0xff]
        %v322 = vld [vmem:[%s221 + $0x320] sm:$0xff]
        %v323 = vld [vmem:[%s221 + $0x328] sm:$0xff]
        %v324 = vld [vmem:[%s221 + $0x330] sm:$0xff]
        %v325 = vld [vmem:[%s221 + $0x338] sm:$0xff]
        %v326 = vld [vmem:[%s221 + $0x340] sm:$0xff]
        %v327 = vld [vmem:[%s221 + $0x348] sm:$0xff]
        %v328 = vld [vmem:[%s221 + $0x350] sm:$0xff]
        %v329 = vld [vmem:[%s221 + $0x358] sm:$0xff]
        %v330 = vld [vmem:[%s221 + $0x360] sm:$0xff]
        %v331 = vld [vmem:[%s221 + $0x368] sm:$0xff]
        %v332 = vld [vmem:[%s221 + $0x370] sm:$0xff]
        %v333 = vld [vmem:[%s221 + $0x378] sm:$0xff]
        %v334 = vld [vmem:[%s221 + $0x380] sm:$0xff]
        %v335 = vld [vmem:[%s221 + $0x388] sm:$0xff]
        %v336 = vld [vmem:[%s221 + $0x390] sm:$0xff]
        %v337 = vld [vmem:[%s221 + $0x398] sm:$0xff]
        %v338 = vld [vmem:[%s221 + $0x3a0] sm:$0xff]
        %v339 = vld [vmem:[%s221 + $0x3a8] sm:$0xff]
        %v340 = vld [vmem:[%s221 + $0x3b0] sm:$0xff]
        %v341 = vld [vmem:[%s221 + $0x3b8] sm:$0xff]
        %v342 = vld [vmem:[%s221 + $0x3c0] sm:$0xff]
        %v343 = vld [vmem:[%s221 + $0x3c8] sm:$0xff]
        %v344 = vld [vmem:[%s221 + $0x3d0] sm:$0xff]
        %v345 = vld [vmem:[%s221 + $0x3d8] sm:$0xff]
        %v346 = vld [vmem:[%s221 + $0x3e0] sm:$0xff]
        %v347 = vld [vmem:[%s221 + $0x3e8] sm:$0xff]
        %v348 = vld [vmem:[%s221 + $0x3f0] sm:$0xff]
        %v349 = vld [vmem:[%s221 + $0x3f8] sm:$0xff]
        %v350 = vunpack.c.l.bf16 %v222
        %v351 = vunpack.c.h.bf16 %v222
        %v352 = vunpack.c.l.bf16 %v223
        %v353 = vunpack.c.h.bf16 %v223
        %v354 = vunpack.c.l.bf16 %v224
        %v355 = vunpack.c.h.bf16 %v224
        %v356 = vunpack.c.l.bf16 %v225
        %v357 = vunpack.c.h.bf16 %v225
        %v358 = vunpack.c.l.bf16 %v226
        %v359 = vunpack.c.h.bf16 %v226
        %v360 = vunpack.c.l.bf16 %v227
        %v361 = vunpack.c.h.bf16 %v227
        %v362 = vunpack.c.l.bf16 %v228
        %v363 = vunpack.c.h.bf16 %v228
        %v364 = vunpack.c.l.bf16 %v229
        %v365 = vunpack.c.h.bf16 %v229
        %v366 = vunpack.c.l.bf16 %v230
        %v367 = vunpack.c.h.bf16 %v230
        %v368 = vunpack.c.l.bf16 %v231
        %v369 = vunpack.c.h.bf16 %v231
        %v370 = vunpack.c.l.bf16 %v232
        %v371 = vunpack.c.h.bf16 %v232
        %v372 = vunpack.c.l.bf16 %v233
        %v373 = vunpack.c.h.bf16 %v233
        %v374 = vunpack.c.l.bf16 %v234
        %v375 = vunpack.c.h.bf16 %v234
        %v376 = vunpack.c.l.bf16 %v235
        %v377 = vunpack.c.h.bf16 %v235
        %v378 = vunpack.c.l.bf16 %v236
        %v379 = vunpack.c.h.bf16 %v236
        %v380 = vunpack.c.l.bf16 %v237
        %v381 = vunpack.c.h.bf16 %v237
        %v382 = vunpack.c.l.bf16 %v238
        %v383 = vunpack.c.h.bf16 %v238
        %v384 = vunpack.c.l.bf16 %v239
        %v385 = vunpack.c.h.bf16 %v239
        %v386 = vunpack.c.l.bf16 %v240
        %v387 = vunpack.c.h.bf16 %v240
        %v388 = vunpack.c.l.bf16 %v241
        %v389 = vunpack.c.h.bf16 %v241
        %v390 = vunpack.c.l.bf16 %v242
        %v391 = vunpack.c.h.bf16 %v242
        %v392 = vunpack.c.l.bf16 %v243
        %v393 = vunpack.c.h.bf16 %v243
        %v394 = vunpack.c.l.bf16 %v244
        %v395 = vunpack.c.h.bf16 %v244
        %v396 = vunpack.c.l.bf16 %v245
        %v397 = vunpack.c.h.bf16 %v245
        %v398 = vunpack.c.l.bf16 %v246
        %v399 = vunpack.c.h.bf16 %v246
        %v400 = vunpack.c.l.bf16 %v247
        %v401 = vunpack.c.h.bf16 %v247
        %v402 = vunpack.c.l.bf16 %v248
        %v403 = vunpack.c.h.bf16 %v248
        %v404 = vunpack.c.l.bf16 %v249
        %v405 = vunpack.c.h.bf16 %v249
        %v406 = vunpack.c.l.bf16 %v250
        %v407 = vunpack.c.h.bf16 %v250
        %v408 = vunpack.c.l.bf16 %v251
        %v409 = vunpack.c.h.bf16 %v251
        %v410 = vunpack.c.l.bf16 %v252
        %v411 = vunpack.c.h.bf16 %v252
        %v412 = vunpack.c.l.bf16 %v253
        %v413 = vunpack.c.h.bf16 %v253
        %v414 = vunpack.c.l.bf16 %v254
        %v415 = vunpack.c.h.bf16 %v254
        %v416 = vunpack.c.l.bf16 %v255
        %v417 = vunpack.c.h.bf16 %v255
        %v418 = vunpack.c.l.bf16 %v256
        %v419 = vunpack.c.h.bf16 %v256
        %v420 = vunpack.c.l.bf16 %v257
        %v421 = vunpack.c.h.bf16 %v257
        %v422 = vunpack.c.l.bf16 %v258
        %v423 = vunpack.c.h.bf16 %v258
        %v424 = vunpack.c.l.bf16 %v259
        %v425 = vunpack.c.h.bf16 %v259
        %v426 = vunpack.c.l.bf16 %v260
        %v427 = vunpack.c.h.bf16 %v260
        %v428 = vunpack.c.l.bf16 %v261
        %v429 = vunpack.c.h.bf16 %v261
        %v430 = vunpack.c.l.bf16 %v262
        %v431 = vunpack.c.h.bf16 %v262
        %v432 = vunpack.c.l.bf16 %v263
        %v433 = vunpack.c.h.bf16 %v263
        %v434 = vunpack.c.l.bf16 %v264
        %v435 = vunpack.c.h.bf16 %v264
        %v436 = vunpack.c.l.bf16 %v265
        %v437 = vunpack.c.h.bf16 %v265
        %v438 = vunpack.c.l.bf16 %v266
        %v439 = vunpack.c.h.bf16 %v266
        %v440 = vunpack.c.l.bf16 %v267
        %v441 = vunpack.c.h.bf16 %v267
        %v442 = vunpack.c.l.bf16 %v268
        %v443 = vunpack.c.h.bf16 %v268
        %v444 = vunpack.c.l.bf16 %v269
        %v445 = vunpack.c.h.bf16 %v269
        %v446 = vunpack.c.l.bf16 %v270
        %v447 = vunpack.c.h.bf16 %v270
        %v448 = vunpack.c.l.bf16 %v271
        %v449 = vunpack.c.h.bf16 %v271
        %v450 = vunpack.c.l.bf16 %v272
        %v451 = vunpack.c.h.bf16 %v272
        %v452 = vunpack.c.l.bf16 %v273
        %v453 = vunpack.c.h.bf16 %v273
        %v454 = vunpack.c.l.bf16 %v274
        %v455 = vunpack.c.h.bf16 %v274
        %v456 = vunpack.c.l.bf16 %v275
        %v457 = vunpack.c.h.bf16 %v275
        %v458 = vunpack.c.l.bf16 %v276
        %v459 = vunpack.c.h.bf16 %v276
        %v460 = vunpack.c.l.bf16 %v277
        %v461 = vunpack.c.h.bf16 %v277
        %v462 = vunpack.c.l.bf16 %v278
        %v463 = vunpack.c.h.bf16 %v278
        %v464 = vunpack.c.l.bf16 %v279
        %v465 = vunpack.c.h.bf16 %v279
        %v466 = vunpack.c.l.bf16 %v280
        %v467 = vunpack.c.h.bf16 %v280
        %v468 = vunpack.c.l.bf16 %v281
        %v469 = vunpack.c.h.bf16 %v281
        %v470 = vunpack.c.l.bf16 %v282
        %v471 = vunpack.c.h.bf16 %v282
        %v472 = vunpack.c.l.bf16 %v283
        %v473 = vunpack.c.h.bf16 %v283
        %v474 = vunpack.c.l.bf16 %v284
        %v475 = vunpack.c.h.bf16 %v284
        %v476 = vunpack.c.l.bf16 %v285
        %v477 = vunpack.c.h.bf16 %v285
        %v478 = vunpack.c.l.bf16 %v286
        %v479 = vunpack.c.h.bf16 %v286
        %v480 = vunpack.c.l.bf16 %v287
        %v481 = vunpack.c.h.bf16 %v287
        %v482 = vunpack.c.l.bf16 %v288
        %v483 = vunpack.c.h.bf16 %v288
        %v484 = vunpack.c.l.bf16 %v289
        %v485 = vunpack.c.h.bf16 %v289
        %v486 = vunpack.c.l.bf16 %v290
        %v487 = vunpack.c.h.bf16 %v290
        %v488 = vunpack.c.l.bf16 %v291
        %v489 = vunpack.c.h.bf16 %v291
        %v490 = vunpack.c.l.bf16 %v292
        %v491 = vunpack.c.h.bf16 %v292
        %v492 = vunpack.c.l.bf16 %v293
        %v493 = vunpack.c.h.bf16 %v293
        %v494 = vunpack.c.l.bf16 %v294
        %v495 = vunpack.c.h.bf16 %v294
        %v496 = vunpack.c.l.bf16 %v295
        %v497 = vunpack.c.h.bf16 %v295
        %v498 = vunpack.c.l.bf16 %v296
        %v499 = vunpack.c.h.bf16 %v296
        %v500 = vunpack.c.l.bf16 %v297
        %v501 = vunpack.c.h.bf16 %v297
        %v502 = vunpack.c.l.bf16 %v298
        %v503 = vunpack.c.h.bf16 %v298
        %v504 = vunpack.c.l.bf16 %v299
        %v505 = vunpack.c.h.bf16 %v299
        %v506 = vunpack.c.l.bf16 %v300
        %v507 = vunpack.c.h.bf16 %v300
        %v508 = vunpack.c.l.bf16 %v301
        %v509 = vunpack.c.h.bf16 %v301
        %v510 = vunpack.c.l.bf16 %v302
        %v511 = vunpack.c.h.bf16 %v302
        %v512 = vunpack.c.l.bf16 %v303
        %v513 = vunpack.c.h.bf16 %v303
        %v514 = vunpack.c.l.bf16 %v304
        %v515 = vunpack.c.h.bf16 %v304
        %v516 = vunpack.c.l.bf16 %v305
        %v517 = vunpack.c.h.bf16 %v305
        %v518 = vunpack.c.l.bf16 %v306
        %v519 = vunpack.c.h.bf16 %v306
        %v520 = vunpack.c.l.bf16 %v307
        %v521 = vunpack.c.h.bf16 %v307
        %v522 = vunpack.c.l.bf16 %v308
        %v523 = vunpack.c.h.bf16 %v308
        %v524 = vunpack.c.l.bf16 %v309
        %v525 = vunpack.c.h.bf16 %v309
        %v526 = vunpack.c.l.bf16 %v310
        %v527 = vunpack.c.h.bf16 %v310
        %v528 = vunpack.c.l.bf16 %v311
        %v529 = vunpack.c.h.bf16 %v311
        %v530 = vunpack.c.l.bf16 %v312
        %v531 = vunpack.c.h.bf16 %v312
        %v532 = vunpack.c.l.bf16 %v313
        %v533 = vunpack.c.h.bf16 %v313
        %v534 = vunpack.c.l.bf16 %v314
        %v535 = vunpack.c.h.bf16 %v314
        %v536 = vunpack.c.l.bf16 %v315
        %v537 = vunpack.c.h.bf16 %v315
        %v538 = vunpack.c.l.bf16 %v316
        %v539 = vunpack.c.h.bf16 %v316
        %v540 = vunpack.c.l.bf16 %v317
        %v541 = vunpack.c.h.bf16 %v317
        %v542 = vunpack.c.l.bf16 %v318
        %v543 = vunpack.c.h.bf16 %v318
        %v544 = vunpack.c.l.bf16 %v319
        %v545 = vunpack.c.h.bf16 %v319
        %v546 = vunpack.c.l.bf16 %v320
        %v547 = vunpack.c.h.bf16 %v320
        %v548 = vunpack.c.l.bf16 %v321
        %v549 = vunpack.c.h.bf16 %v321
        %v550 = vunpack.c.l.bf16 %v322
        %v551 = vunpack.c.h.bf16 %v322
        %v552 = vunpack.c.l.bf16 %v323
        %v553 = vunpack.c.h.bf16 %v323
        %v554 = vunpack.c.l.bf16 %v324
        %v555 = vunpack.c.h.bf16 %v324
        %v556 = vunpack.c.l.bf16 %v325
        %v557 = vunpack.c.h.bf16 %v325
        %v558 = vunpack.c.l.bf16 %v326
        %v559 = vunpack.c.h.bf16 %v326
        %v560 = vunpack.c.l.bf16 %v327
        %v561 = vunpack.c.h.bf16 %v327
        %v562 = vunpack.c.l.bf16 %v328
        %v563 = vunpack.c.h.bf16 %v328
        %v564 = vunpack.c.l.bf16 %v329
        %v565 = vunpack.c.h.bf16 %v329
        %v566 = vunpack.c.l.bf16 %v330
        %v567 = vunpack.c.h.bf16 %v330
        %v568 = vunpack.c.l.bf16 %v331
        %v569 = vunpack.c.h.bf16 %v331
        %v570 = vunpack.c.l.bf16 %v332
        %v571 = vunpack.c.h.bf16 %v332
        %v572 = vunpack.c.l.bf16 %v333
        %v573 = vunpack.c.h.bf16 %v333
        %v574 = vunpack.c.l.bf16 %v334
        %v575 = vunpack.c.h.bf16 %v334
        %v576 = vunpack.c.l.bf16 %v335
        %v577 = vunpack.c.h.bf16 %v335
        %v578 = vunpack.c.l.bf16 %v336
        %v579 = vunpack.c.h.bf16 %v336
        %v580 = vunpack.c.l.bf16 %v337
        %v581 = vunpack.c.h.bf16 %v337
        %v582 = vunpack.c.l.bf16 %v338
        %v583 = vunpack.c.h.bf16 %v338
        %v584 = vunpack.c.l.bf16 %v339
        %v585 = vunpack.c.h.bf16 %v339
        %v586 = vunpack.c.l.bf16 %v340
        %v587 = vunpack.c.h.bf16 %v340
        %v588 = vunpack.c.l.bf16 %v341
        %v589 = vunpack.c.h.bf16 %v341
        %v590 = vunpack.c.l.bf16 %v342
        %v591 = vunpack.c.h.bf16 %v342
        %v592 = vunpack.c.l.bf16 %v343
        %v593 = vunpack.c.h.bf16 %v343
        %v594 = vunpack.c.l.bf16 %v344
        %v595 = vunpack.c.h.bf16 %v344
        %v596 = vunpack.c.l.bf16 %v345
        %v597 = vunpack.c.h.bf16 %v345
        %v598 = vunpack.c.l.bf16 %v346
        %v599 = vunpack.c.h.bf16 %v346
        %v600 = vunpack.c.l.bf16 %v347
        %v601 = vunpack.c.h.bf16 %v347
        %v602 = vunpack.c.l.bf16 %v348
        %v603 = vunpack.c.h.bf16 %v348
        %v604 = vunpack.c.l.bf16 %v349
        %v605 = vunpack.c.h.bf16 %v349
        %v606 = vadd.f32 %v350, %v358
        %v607 = vadd.f32 %v606, %v366
        %v608 = vadd.f32 %v607, %v374
        %v609 = vadd.f32 %v608, %v382
        %v610 = vadd.f32 %v609, %v390
        %v611 = vadd.f32 %v610, %v398
        %v612 = vadd.f32 %v611, %v406
        %v613 = vadd.f32 %v612, %v414
        %v614 = vadd.f32 %v613, %v422
        %v615 = vadd.f32 %v614, %v430
        %v616 = vadd.f32 %v615, %v438
        %v617 = vadd.f32 %v616, %v446
        %v618 = vadd.f32 %v617, %v454
        %v619 = vadd.f32 %v618, %v462
        %v620 = vadd.f32 %v619, %v470
        %v621 = vadd.f32 %v620, %v478
        %v622 = vadd.f32 %v621, %v486
        %v623 = vadd.f32 %v622, %v494
        %v624 = vadd.f32 %v623, %v502
        %v625 = vadd.f32 %v624, %v510
        %v626 = vadd.f32 %v625, %v518
        %v627 = vadd.f32 %v626, %v526
        %v628 = vadd.f32 %v627, %v534
        %v629 = vadd.f32 %v628, %v542
        %v630 = vadd.f32 %v629, %v550
        %v631 = vadd.f32 %v630, %v558
        %v632 = vadd.f32 %v631, %v566
        %v633 = vadd.f32 %v632, %v574
        %v634 = vadd.f32 %v633, %v582
        %v635 = vadd.f32 %v634, %v590
        %v636 = vadd.f32 %v635, %v598
        %v637 = vrot.slane %v636, 4
        %v638 = vadd.f32 %v636, %v637
        %v639 = vrot.slane %v638, 2
        %v640 = vadd.f32 %v638, %v639
        %v641 = vrot.slane %v640, 1
        %v642 = vadd.f32 %v640, %v641
        %v643 = vadd.f32 %v351, %v359
        %v644 = vadd.f32 %v643, %v367
        %v645 = vadd.f32 %v644, %v375
        %v646 = vadd.f32 %v645, %v383
        %v647 = vadd.f32 %v646, %v391
        %v648 = vadd.f32 %v647, %v399
        %v649 = vadd.f32 %v648, %v407
        %v650 = vadd.f32 %v649, %v415
        %v651 = vadd.f32 %v650, %v423
        %v652 = vadd.f32 %v651, %v431
        %v653 = vadd.f32 %v652, %v439
        %v654 = vadd.f32 %v653, %v447
        %v655 = vadd.f32 %v654, %v455
        %v656 = vadd.f32 %v655, %v463
        %v657 = vadd.f32 %v656, %v471
        %v658 = vadd.f32 %v657, %v479
        %v659 = vadd.f32 %v658, %v487
        %v660 = vadd.f32 %v659, %v495
        %v661 = vadd.f32 %v660, %v503
        %v662 = vadd.f32 %v661, %v511
        %v663 = vadd.f32 %v662, %v519
        %v664 = vadd.f32 %v663, %v527
        %v665 = vadd.f32 %v664, %v535
        %v666 = vadd.f32 %v665, %v543
        %v667 = vadd.f32 %v666, %v551
        %v668 = vadd.f32 %v667, %v559
        %v669 = vadd.f32 %v668, %v567
        %v670 = vadd.f32 %v669, %v575
        %v671 = vadd.f32 %v670, %v583
        %v672 = vadd.f32 %v671, %v591
        %v673 = vadd.f32 %v672, %v599
        %v674 = vrot.slane %v673, 4
        %v675 = vadd.f32 %v673, %v674
        %v676 = vrot.slane %v675, 2
        %v677 = vadd.f32 %v675, %v676
        %v678 = vrot.slane %v677, 1
        %v679 = vadd.f32 %v677, %v678
        %v680 = vadd.f32 %v352, %v360
        %v681 = vadd.f32 %v680, %v368
        %v682 = vadd.f32 %v681, %v376
        %v683 = vadd.f32 %v682, %v384
        %v684 = vadd.f32 %v683, %v392
        %v685 = vadd.f32 %v684, %v400
        %v686 = vadd.f32 %v685, %v408
        %v687 = vadd.f32 %v686, %v416
        %v688 = vadd.f32 %v687, %v424
        %v689 = vadd.f32 %v688, %v432
        %v690 = vadd.f32 %v689, %v440
        %v691 = vadd.f32 %v690, %v448
        %v692 = vadd.f32 %v691, %v456
        %v693 = vadd.f32 %v692, %v464
        %v694 = vadd.f32 %v693, %v472
        %v695 = vadd.f32 %v694, %v480
        %v696 = vadd.f32 %v695, %v488
        %v697 = vadd.f32 %v696, %v496
        %v698 = vadd.f32 %v697, %v504
        %v699 = vadd.f32 %v698, %v512
        %v700 = vadd.f32 %v699, %v520
        %v701 = vadd.f32 %v700, %v528
        %v702 = vadd.f32 %v701, %v536
        %v703 = vadd.f32 %v702, %v544
        %v704 = vadd.f32 %v703, %v552
        %v705 = vadd.f32 %v704, %v560
        %v706 = vadd.f32 %v705, %v568
        %v707 = vadd.f32 %v706, %v576
        %v708 = vadd.f32 %v707, %v584
        %v709 = vadd.f32 %v708, %v592
        %v710 = vadd.f32 %v709, %v600
        %v711 = vrot.slane %v710, 4
        %v712 = vadd.f32 %v710, %v711
        %v713 = vrot.slane %v712, 2
        %v714 = vadd.f32 %v712, %v713
        %v715 = vrot.slane %v714, 1
        %v716 = vadd.f32 %v714, %v715
        %v717 = vadd.f32 %v353, %v361
        %v718 = vadd.f32 %v717, %v369
        %v719 = vadd.f32 %v718, %v377
        %v720 = vadd.f32 %v719, %v385
        %v721 = vadd.f32 %v720, %v393
        %v722 = vadd.f32 %v721, %v401
        %v723 = vadd.f32 %v722, %v409
        %v724 = vadd.f32 %v723, %v417
        %v725 = vadd.f32 %v724, %v425
        %v726 = vadd.f32 %v725, %v433
        %v727 = vadd.f32 %v726, %v441
        %v728 = vadd.f32 %v727, %v449
        %v729 = vadd.f32 %v728, %v457
        %v730 = vadd.f32 %v729, %v465
        %v731 = vadd.f32 %v730, %v473
        %v732 = vadd.f32 %v731, %v481
        %v733 = vadd.f32 %v732, %v489
        %v734 = vadd.f32 %v733, %v497
        %v735 = vadd.f32 %v734, %v505
        %v736 = vadd.f32 %v735, %v513
        %v737 = vadd.f32 %v736, %v521
        %v738 = vadd.f32 %v737, %v529
        %v739 = vadd.f32 %v738, %v537
        %v740 = vadd.f32 %v739, %v545
        %v741 = vadd.f32 %v740, %v553
        %v742 = vadd.f32 %v741, %v561
        %v743 = vadd.f32 %v742, %v569
        %v744 = vadd.f32 %v743, %v577
        %v745 = vadd.f32 %v744, %v585
        %v746 = vadd.f32 %v745, %v593
        %v747 = vadd.f32 %v746, %v601
        %v748 = vrot.slane %v747, 4
        %v749 = vadd.f32 %v747, %v748
        %v750 = vrot.slane %v749, 2
        %v751 = vadd.f32 %v749, %v750
        %v752 = vrot.slane %v751, 1
        %v753 = vadd.f32 %v751, %v752
        %v754 = vadd.f32 %v354, %v362
        %v755 = vadd.f32 %v754, %v370
        %v756 = vadd.f32 %v755, %v378
        %v757 = vadd.f32 %v756, %v386
        %v758 = vadd.f32 %v757, %v394
        %v759 = vadd.f32 %v758, %v402
        %v760 = vadd.f32 %v759, %v410
        %v761 = vadd.f32 %v760, %v418
        %v762 = vadd.f32 %v761, %v426
        %v763 = vadd.f32 %v762, %v434
        %v764 = vadd.f32 %v763, %v442
        %v765 = vadd.f32 %v764, %v450
        %v766 = vadd.f32 %v765, %v458
        %v767 = vadd.f32 %v766, %v466
        %v768 = vadd.f32 %v767, %v474
        %v769 = vadd.f32 %v768, %v482
        %v770 = vadd.f32 %v769, %v490
        %v771 = vadd.f32 %v770, %v498
        %v772 = vadd.f32 %v771, %v506
        %v773 = vadd.f32 %v772, %v514
        %v774 = vadd.f32 %v773, %v522
        %v775 = vadd.f32 %v774, %v530
        %v776 = vadd.f32 %v775, %v538
        %v777 = vadd.f32 %v776, %v546
        %v778 = vadd.f32 %v777, %v554
        %v779 = vadd.f32 %v778, %v562
        %v780 = vadd.f32 %v779, %v570
        %v781 = vadd.f32 %v780, %v578
        %v782 = vadd.f32 %v781, %v586
        %v783 = vadd.f32 %v782, %v594
        %v784 = vadd.f32 %v783, %v602
        %v785 = vrot.slane %v784, 4
        %v786 = vadd.f32 %v784, %v785
        %v787 = vrot.slane %v786, 2
        %v788 = vadd.f32 %v786, %v787
        %v789 = vrot.slane %v788, 1
        %v790 = vadd.f32 %v788, %v789
        %v791 = vadd.f32 %v355, %v363
        %v792 = vadd.f32 %v791, %v371
        %v793 = vadd.f32 %v792, %v379
        %v794 = vadd.f32 %v793, %v387
        %v795 = vadd.f32 %v794, %v395
        %v796 = vadd.f32 %v795, %v403
        %v797 = vadd.f32 %v796, %v411
        %v798 = vadd.f32 %v797, %v419
        %v799 = vadd.f32 %v798, %v427
        %v800 = vadd.f32 %v799, %v435
        %v801 = vadd.f32 %v800, %v443
        %v802 = vadd.f32 %v801, %v451
        %v803 = vadd.f32 %v802, %v459
        %v804 = vadd.f32 %v803, %v467
        %v805 = vadd.f32 %v804, %v475
        %v806 = vadd.f32 %v805, %v483
        %v807 = vadd.f32 %v806, %v491
        %v808 = vadd.f32 %v807, %v499
        %v809 = vadd.f32 %v808, %v507
        %v810 = vadd.f32 %v809, %v515
        %v811 = vadd.f32 %v810, %v523
        %v812 = vadd.f32 %v811, %v531
        %v813 = vadd.f32 %v812, %v539
        %v814 = vadd.f32 %v813, %v547
        %v815 = vadd.f32 %v814, %v555
        %v816 = vadd.f32 %v815, %v563
        %v817 = vadd.f32 %v816, %v571
        %v818 = vadd.f32 %v817, %v579
        %v819 = vadd.f32 %v818, %v587
        %v820 = vadd.f32 %v819, %v595
        %v821 = vadd.f32 %v820, %v603
        %v822 = vrot.slane %v821, 4
        %v823 = vadd.f32 %v821, %v822
        %v824 = vrot.slane %v823, 2
        %v825 = vadd.f32 %v823, %v824
        %v826 = vrot.slane %v825, 1
        %v827 = vadd.f32 %v825, %v826
        %v828 = vadd.f32 %v356, %v364
        %v829 = vadd.f32 %v828, %v372
        %v830 = vadd.f32 %v829, %v380
        %v831 = vadd.f32 %v830, %v388
        %v832 = vadd.f32 %v831, %v396
        %v833 = vadd.f32 %v832, %v404
        %v834 = vadd.f32 %v833, %v412
        %v835 = vadd.f32 %v834, %v420
        %v836 = vadd.f32 %v835, %v428
        %v837 = vadd.f32 %v836, %v436
        %v838 = vadd.f32 %v837, %v444
        %v839 = vadd.f32 %v838, %v452
        %v840 = vadd.f32 %v839, %v460
        %v841 = vadd.f32 %v840, %v468
        %v842 = vadd.f32 %v841, %v476
        %v843 = vadd.f32 %v842, %v484
        %v844 = vadd.f32 %v843, %v492
        %v845 = vadd.f32 %v844, %v500
        %v846 = vadd.f32 %v845, %v508
        %v847 = vadd.f32 %v846, %v516
        %v848 = vadd.f32 %v847, %v524
        %v849 = vadd.f32 %v848, %v532
        %v850 = vadd.f32 %v849, %v540
        %v851 = vadd.f32 %v850, %v548
        %v852 = vadd.f32 %v851, %v556
        %v853 = vadd.f32 %v852, %v564
        %v854 = vadd.f32 %v853, %v572
        %v855 = vadd.f32 %v854, %v580
        %v856 = vadd.f32 %v855, %v588
        %v857 = vadd.f32 %v856, %v596
        %v858 = vadd.f32 %v857, %v604
        %v859 = vrot.slane %v858, 4
        %v860 = vadd.f32 %v858, %v859
        %v861 = vrot.slane %v860, 2
        %v862 = vadd.f32 %v860, %v861
        %v863 = vrot.slane %v862, 1
        %v864 = vadd.f32 %v862, %v863
        %v865 = vadd.f32 %v357, %v365
        %v866 = vadd.f32 %v865, %v373
        %v867 = vadd.f32 %v866, %v381
        %v868 = vadd.f32 %v867, %v389
        %v869 = vadd.f32 %v868, %v397
        %v870 = vadd.f32 %v869, %v405
        %v871 = vadd.f32 %v870, %v413
        %v872 = vadd.f32 %v871, %v421
        %v873 = vadd.f32 %v872, %v429
        %v874 = vadd.f32 %v873, %v437
        %v875 = vadd.f32 %v874, %v445
        %v876 = vadd.f32 %v875, %v453
        %v877 = vadd.f32 %v876, %v461
        %v878 = vadd.f32 %v877, %v469
        %v879 = vadd.f32 %v878, %v477
        %v880 = vadd.f32 %v879, %v485
        %v881 = vadd.f32 %v880, %v493
        %v882 = vadd.f32 %v881, %v501
        %v883 = vadd.f32 %v882, %v509
        %v884 = vadd.f32 %v883, %v517
        %v885 = vadd.f32 %v884, %v525
        %v886 = vadd.f32 %v885, %v533
        %v887 = vadd.f32 %v886, %v541
        %v888 = vadd.f32 %v887, %v549
        %v889 = vadd.f32 %v888, %v557
        %v890 = vadd.f32 %v889, %v565
        %v891 = vadd.f32 %v890, %v573
        %v892 = vadd.f32 %v891, %v581
        %v893 = vadd.f32 %v892, %v589
        %v894 = vadd.f32 %v893, %v597
        %v895 = vadd.f32 %v894, %v605
        %v896 = vrot.slane %v895, 4
        %v897 = vadd.f32 %v895, %v896
        %v898 = vrot.slane %v897, 2
        %v899 = vadd.f32 %v897, %v898
        %v900 = vrot.slane %v899, 1
        %v901 = vadd.f32 %v899, %v900
        %v902 = vld [vmem:[%s1] sm:$0xff]
        %v904 = vperm.slane %v902, 0
        %v905 = vperm.slane %v902, 1
        %v906 = vperm.slane %v902, 2
        %v907 = vperm.slane %v902, 3
        %v908 = vperm.slane %v902, 4
        %v909 = vperm.slane %v902, 5
        %v910 = vperm.slane %v902, 6
        %v911 = vperm.slane %v902, 7
        %v920 = vmul.f32 %v642, %v904
        %v921 = vmul.f32 %v679, %v905
        %v922 = vmul.f32 %v716, %v906
        %v923 = vmul.f32 %v753, %v907
        %v924 = vmul.f32 %v790, %v908
        %v925 = vmul.f32 %v827, %v909
        %v926 = vmul.f32 %v864, %v910
        %v927 = vmul.f32 %v901, %v911
        %v928 = vld [vmem:[%s2] sm:$0xff]
        %v930 = vperm.slane %v928, 0
        %v931 = vperm.slane %v928, 1
        %v932 = vperm.slane %v928, 2
        %v933 = vperm.slane %v928, 3
        %v934 = vperm.slane %v928, 4
        %v935 = vperm.slane %v928, 5
        %v936 = vperm.slane %v928, 6
        %v937 = vperm.slane %v928, 7
        %v946 = vadd.f32 %v920, %v930
        %v947 = vadd.f32 %v921, %v931
        %v948 = vadd.f32 %v922, %v932
        %v949 = vadd.f32 %v923, %v933
        %v950 = vadd.f32 %v924, %v934
        %v951 = vadd.f32 %v925, %v935
        %v952 = vadd.f32 %v926, %v936
        %v953 = vadd.f32 %v927, %v937
        %v954 = vmax.f32 %v946, 0.0
        %v955 = vmax.f32 %v947, 0.0
        %v956 = vmax.f32 %v948, 0.0
        %v957 = vmax.f32 %v949, 0.0
        %v958 = vmax.f32 %v950, 0.0
        %v959 = vmax.f32 %v951, 0.0
        %v960 = vmax.f32 %v952, 0.0
        %v961 = vmax.f32 %v953, 0.0
        %v962 = vld [vmem:[%s3] sm:$0xff]
        %v963 = vld [vmem:[%s3 + $0x8] sm:$0xff]
        %v964 = vld [vmem:[%s3 + $0x10] sm:$0xff]
        %v965 = vld [vmem:[%s3 + $0x18] sm:$0xff]
        %v966 = vld [vmem:[%s3 + $0x20] sm:$0xff]
        %v967 = vld [vmem:[%s3 + $0x28] sm:$0xff]
        %v968 = vld [vmem:[%s3 + $0x30] sm:$0xff]
        %v969 = vld [vmem:[%s3 + $0x38] sm:$0xff]
        %v970 = vld [vmem:[%s3 + $0x40] sm:$0xff]
        %v971 = vld [vmem:[%s3 + $0x48] sm:$0xff]
        %v972 = vld [vmem:[%s3 + $0x50] sm:$0xff]
        %v973 = vld [vmem:[%s3 + $0x58] sm:$0xff]
        %v974 = vld [vmem:[%s3 + $0x60] sm:$0xff]
        %v975 = vld [vmem:[%s3 + $0x68] sm:$0xff]
        %v976 = vld [vmem:[%s3 + $0x70] sm:$0xff]
        %v977 = vld [vmem:[%s3 + $0x78] sm:$0xff]
        %v978 = vld [vmem:[%s3 + $0x80] sm:$0xff]
        %v979 = vld [vmem:[%s3 + $0x88] sm:$0xff]
        %v980 = vld [vmem:[%s3 + $0x90] sm:$0xff]
        %v981 = vld [vmem:[%s3 + $0x98] sm:$0xff]
        %v982 = vld [vmem:[%s3 + $0xa0] sm:$0xff]
        %v983 = vld [vmem:[%s3 + $0xa8] sm:$0xff]
        %v984 = vld [vmem:[%s3 + $0xb0] sm:$0xff]
        %v985 = vld [vmem:[%s3 + $0xb8] sm:$0xff]
        %v986 = vld [vmem:[%s3 + $0xc0] sm:$0xff]
        %v987 = vld [vmem:[%s3 + $0xc8] sm:$0xff]
        %v988 = vld [vmem:[%s3 + $0xd0] sm:$0xff]
        %v989 = vld [vmem:[%s3 + $0xd8] sm:$0xff]
        %v990 = vld [vmem:[%s3 + $0xe0] sm:$0xff]
        %v991 = vld [vmem:[%s3 + $0xe8] sm:$0xff]
        %v992 = vld [vmem:[%s3 + $0xf0] sm:$0xff]
        %v993 = vld [vmem:[%s3 + $0xf8] sm:$0xff]
        %v994 = vld [vmem:[%s3 + $0x100] sm:$0xff]
        %v995 = vld [vmem:[%s3 + $0x108] sm:$0xff]
        %v996 = vld [vmem:[%s3 + $0x110] sm:$0xff]
        %v997 = vld [vmem:[%s3 + $0x118] sm:$0xff]
        %v998 = vld [vmem:[%s3 + $0x120] sm:$0xff]
        %v999 = vld [vmem:[%s3 + $0x128] sm:$0xff]
        %v1000 = vld [vmem:[%s3 + $0x130] sm:$0xff]
        %v1001 = vld [vmem:[%s3 + $0x138] sm:$0xff]
        %v1002 = vld [vmem:[%s3 + $0x140] sm:$0xff]
        %v1003 = vld [vmem:[%s3 + $0x148] sm:$0xff]
        %v1004 = vld [vmem:[%s3 + $0x150] sm:$0xff]
        %v1005 = vld [vmem:[%s3 + $0x158] sm:$0xff]
        %v1006 = vld [vmem:[%s3 + $0x160] sm:$0xff]
        %v1007 = vld [vmem:[%s3 + $0x168] sm:$0xff]
        %v1008 = vld [vmem:[%s3 + $0x170] sm:$0xff]
        %v1009 = vld [vmem:[%s3 + $0x178] sm:$0xff]
        %v1010 = vld [vmem:[%s3 + $0x180] sm:$0xff]
        %v1011 = vld [vmem:[%s3 + $0x188] sm:$0xff]
        %v1012 = vld [vmem:[%s3 + $0x190] sm:$0xff]
        %v1013 = vld [vmem:[%s3 + $0x198] sm:$0xff]
        %v1014 = vld [vmem:[%s3 + $0x1a0] sm:$0xff]
        %v1015 = vld [vmem:[%s3 + $0x1a8] sm:$0xff]
        %v1016 = vld [vmem:[%s3 + $0x1b0] sm:$0xff]
        %v1017 = vld [vmem:[%s3 + $0x1b8] sm:$0xff]
        %v1018 = vld [vmem:[%s3 + $0x1c0] sm:$0xff]
        %v1019 = vld [vmem:[%s3 + $0x1c8] sm:$0xff]
        %v1020 = vld [vmem:[%s3 + $0x1d0] sm:$0xff]
        %v1021 = vld [vmem:[%s3 + $0x1d8] sm:$0xff]
        %v1022 = vld [vmem:[%s3 + $0x1e0] sm:$0xff]
        %v1023 = vld [vmem:[%s3 + $0x1e8] sm:$0xff]
        %v1024 = vld [vmem:[%s3 + $0x1f0] sm:$0xff]
        %v1025 = vld [vmem:[%s3 + $0x1f8] sm:$0xff]
        %v1026 = vld [vmem:[%s3 + $0x200] sm:$0xff]
        %v1027 = vld [vmem:[%s3 + $0x208] sm:$0xff]
        %v1028 = vld [vmem:[%s3 + $0x210] sm:$0xff]
        %v1029 = vld [vmem:[%s3 + $0x218] sm:$0xff]
        %v1030 = vld [vmem:[%s3 + $0x220] sm:$0xff]
        %v1031 = vld [vmem:[%s3 + $0x228] sm:$0xff]
        %v1032 = vld [vmem:[%s3 + $0x230] sm:$0xff]
        %v1033 = vld [vmem:[%s3 + $0x238] sm:$0xff]
        %v1034 = vld [vmem:[%s3 + $0x240] sm:$0xff]
        %v1035 = vld [vmem:[%s3 + $0x248] sm:$0xff]
        %v1036 = vld [vmem:[%s3 + $0x250] sm:$0xff]
        %v1037 = vld [vmem:[%s3 + $0x258] sm:$0xff]
        %v1038 = vld [vmem:[%s3 + $0x260] sm:$0xff]
        %v1039 = vld [vmem:[%s3 + $0x268] sm:$0xff]
        %v1040 = vld [vmem:[%s3 + $0x270] sm:$0xff]
        %v1041 = vld [vmem:[%s3 + $0x278] sm:$0xff]
        %v1042 = vld [vmem:[%s3 + $0x280] sm:$0xff]
        %v1043 = vld [vmem:[%s3 + $0x288] sm:$0xff]
        %v1044 = vld [vmem:[%s3 + $0x290] sm:$0xff]
        %v1045 = vld [vmem:[%s3 + $0x298] sm:$0xff]
        %v1046 = vld [vmem:[%s3 + $0x2a0] sm:$0xff]
        %v1047 = vld [vmem:[%s3 + $0x2a8] sm:$0xff]
        %v1048 = vld [vmem:[%s3 + $0x2b0] sm:$0xff]
        %v1049 = vld [vmem:[%s3 + $0x2b8] sm:$0xff]
        %v1050 = vld [vmem:[%s3 + $0x2c0] sm:$0xff]
        %v1051 = vld [vmem:[%s3 + $0x2c8] sm:$0xff]
        %v1052 = vld [vmem:[%s3 + $0x2d0] sm:$0xff]
        %v1053 = vld [vmem:[%s3 + $0x2d8] sm:$0xff]
        %v1054 = vld [vmem:[%s3 + $0x2e0] sm:$0xff]
        %v1055 = vld [vmem:[%s3 + $0x2e8] sm:$0xff]
        %v1056 = vld [vmem:[%s3 + $0x2f0] sm:$0xff]
        %v1057 = vld [vmem:[%s3 + $0x2f8] sm:$0xff]
        %v1058 = vld [vmem:[%s3 + $0x300] sm:$0xff]
        %v1059 = vld [vmem:[%s3 + $0x308] sm:$0xff]
        %v1060 = vld [vmem:[%s3 + $0x310] sm:$0xff]
        %v1061 = vld [vmem:[%s3 + $0x318] sm:$0xff]
        %v1062 = vld [vmem:[%s3 + $0x320] sm:$0xff]
        %v1063 = vld [vmem:[%s3 + $0x328] sm:$0xff]
        %v1064 = vld [vmem:[%s3 + $0x330] sm:$0xff]
        %v1065 = vld [vmem:[%s3 + $0x338] sm:$0xff]
        %v1066 = vld [vmem:[%s3 + $0x340] sm:$0xff]
        %v1067 = vld [vmem:[%s3 + $0x348] sm:$0xff]
        %v1068 = vld [vmem:[%s3 + $0x350] sm:$0xff]
        %v1069 = vld [vmem:[%s3 + $0x358] sm:$0xff]
        %v1070 = vld [vmem:[%s3 + $0x360] sm:$0xff]
        %v1071 = vld [vmem:[%s3 + $0x368] sm:$0xff]
        %v1072 = vld [vmem:[%s3 + $0x370] sm:$0xff]
        %v1073 = vld [vmem:[%s3 + $0x378] sm:$0xff]
        %v1074 = vld [vmem:[%s3 + $0x380] sm:$0xff]
        %v1075 = vld [vmem:[%s3 + $0x388] sm:$0xff]
        %v1076 = vld [vmem:[%s3 + $0x390] sm:$0xff]
        %v1077 = vld [vmem:[%s3 + $0x398] sm:$0xff]
        %v1078 = vld [vmem:[%s3 + $0x3a0] sm:$0xff]
        %v1079 = vld [vmem:[%s3 + $0x3a8] sm:$0xff]
        %v1080 = vld [vmem:[%s3 + $0x3b0] sm:$0xff]
        %v1081 = vld [vmem:[%s3 + $0x3b8] sm:$0xff]
        %v1082 = vld [vmem:[%s3 + $0x3c0] sm:$0xff]
        %v1083 = vld [vmem:[%s3 + $0x3c8] sm:$0xff]
        %v1084 = vld [vmem:[%s3 + $0x3d0] sm:$0xff]
        %v1085 = vld [vmem:[%s3 + $0x3d8] sm:$0xff]
        %v1086 = vld [vmem:[%s3 + $0x3e0] sm:$0xff]
        %v1087 = vld [vmem:[%s3 + $0x3e8] sm:$0xff]
        %v1088 = vld [vmem:[%s3 + $0x3f0] sm:$0xff]
        %v1089 = vld [vmem:[%s3 + $0x3f8] sm:$0xff]
        %v1090 = vld [vmem:[%s4] sm:$0x1]
        %1091 = vmatpush.msra.mxu0 %v977
        %1092 = vmatpush.msra.mxu0 %v976
        %1093 = vmatpush.msra.mxu0 %v975
        %1094 = vmatpush.msra.mxu0 %v974
        %1095 = vmatpush.msra.mxu0 %v973
        %1096 = vmatpush.msra.mxu0 %v972
        %1097 = vmatpush.msra.mxu0 %v971
        %1098 = vmatpush.msra.mxu0 %v970
        %1099 = vmatpush.msra.mxu0 %v969
        %1100 = vmatpush.msra.mxu0 %v968
        %1101 = vmatpush.msra.mxu0 %v967
        %1102 = vmatpush.msra.mxu0 %v966
        %1103 = vmatpush.msra.mxu0 %v965
        %1104 = vmatpush.msra.mxu0 %v964
        %1105 = vmatpush.msra.mxu0 %v963
        %1106 = vmatpush.msra.mxu0 %v962
        %1107 = vmatmul.f32.gmra.mxu0 %v954
        %v1108 = vpop.f32.mrf.mxu0
        %v1109 = vadd.f32 %v1090, %v1108
        %1110 = vdwg.mxu0
        %1111 = vmatpush.msra.mxu0 %v993
        %1112 = vmatpush.msra.mxu0 %v992
        %1113 = vmatpush.msra.mxu0 %v991
        %1114 = vmatpush.msra.mxu0 %v990
        %1115 = vmatpush.msra.mxu0 %v989
        %1116 = vmatpush.msra.mxu0 %v988
        %1117 = vmatpush.msra.mxu0 %v987
        %1118 = vmatpush.msra.mxu0 %v986
        %1119 = vmatpush.msra.mxu0 %v985
        %1120 = vmatpush.msra.mxu0 %v984
        %1121 = vmatpush.msra.mxu0 %v983
        %1122 = vmatpush.msra.mxu0 %v982
        %1123 = vmatpush.msra.mxu0 %v981
        %1124 = vmatpush.msra.mxu0 %v980
        %1125 = vmatpush.msra.mxu0 %v979
        %1126 = vmatpush.msra.mxu0 %v978
        %1127 = vmatmul.f32.gmra.mxu0 %v955
        %v1128 = vpop.f32.mrf.mxu0
        %v1129 = vadd.f32 %v1109, %v1128
        %1130 = vdwg.mxu0
        %1131 = vmatpush.msra.mxu0 %v1009
        %1132 = vmatpush.msra.mxu0 %v1008
        %1133 = vmatpush.msra.mxu0 %v1007
        %1134 = vmatpush.msra.mxu0 %v1006
        %1135 = vmatpush.msra.mxu0 %v1005
        %1136 = vmatpush.msra.mxu0 %v1004
        %1137 = vmatpush.msra.mxu0 %v1003
        %1138 = vmatpush.msra.mxu0 %v1002
        %1139 = vmatpush.msra.mxu0 %v1001
        %1140 = vmatpush.msra.mxu0 %v1000
        %1141 = vmatpush.msra.mxu0 %v999
        %1142 = vmatpush.msra.mxu0 %v998
        %1143 = vmatpush.msra.mxu0 %v997
        %1144 = vmatpush.msra.mxu0 %v996
        %1145 = vmatpush.msra.mxu0 %v995
        %1146 = vmatpush.msra.mxu0 %v994
        %1147 = vmatmul.f32.gmra.mxu0 %v956
        %v1148 = vpop.f32.mrf.mxu0
        %v1149 = vadd.f32 %v1129, %v1148
        %1150 = vdwg.mxu0
        %1151 = vmatpush.msra.mxu0 %v1025
        %1152 = vmatpush.msra.mxu0 %v1024
        %1153 = vmatpush.msra.mxu0 %v1023
        %1154 = vmatpush.msra.mxu0 %v1022
        %1155 = vmatpush.msra.mxu0 %v1021
        %1156 = vmatpush.msra.mxu0 %v1020
        %1157 = vmatpush.msra.mxu0 %v1019
        %1158 = vmatpush.msra.mxu0 %v1018
        %1159 = vmatpush.msra.mxu0 %v1017
        %1160 = vmatpush.msra.mxu0 %v1016
        %1161 = vmatpush.msra.mxu0 %v1015
        %1162 = vmatpush.msra.mxu0 %v1014
        %1163 = vmatpush.msra.mxu0 %v1013
        %1164 = vmatpush.msra.mxu0 %v1012
        %1165 = vmatpush.msra.mxu0 %v1011
        %1166 = vmatpush.msra.mxu0 %v1010
        %1167 = vmatmul.f32.gmra.mxu0 %v957
        %v1168 = vpop.f32.mrf.mxu0
        %v1169 = vadd.f32 %v1149, %v1168
        %1170 = vdwg.mxu0
        %1171 = vmatpush.msra.mxu0 %v1041
        %1172 = vmatpush.msra.mxu0 %v1040
        %1173 = vmatpush.msra.mxu0 %v1039
        %1174 = vmatpush.msra.mxu0 %v1038
        %1175 = vmatpush.msra.mxu0 %v1037
        %1176 = vmatpush.msra.mxu0 %v1036
        %1177 = vmatpush.msra.mxu0 %v1035
        %1178 = vmatpush.msra.mxu0 %v1034
        %1179 = vmatpush.msra.mxu0 %v1033
        %1180 = vmatpush.msra.mxu0 %v1032
        %1181 = vmatpush.msra.mxu0 %v1031
        %1182 = vmatpush.msra.mxu0 %v1030
        %1183 = vmatpush.msra.mxu0 %v1029
        %1184 = vmatpush.msra.mxu0 %v1028
        %1185 = vmatpush.msra.mxu0 %v1027
        %1186 = vmatpush.msra.mxu0 %v1026
        %1187 = vmatmul.f32.gmra.mxu0 %v958
        %v1188 = vpop.f32.mrf.mxu0
        %v1189 = vadd.f32 %v1169, %v1188
        %1190 = vdwg.mxu0
        %1191 = vmatpush.msra.mxu0 %v1057
        %1192 = vmatpush.msra.mxu0 %v1056
        %1193 = vmatpush.msra.mxu0 %v1055
        %1194 = vmatpush.msra.mxu0 %v1054
        %1195 = vmatpush.msra.mxu0 %v1053
        %1196 = vmatpush.msra.mxu0 %v1052
        %1197 = vmatpush.msra.mxu0 %v1051
        %1198 = vmatpush.msra.mxu0 %v1050
        %1199 = vmatpush.msra.mxu0 %v1049
        %1200 = vmatpush.msra.mxu0 %v1048
        %1201 = vmatpush.msra.mxu0 %v1047
        %1202 = vmatpush.msra.mxu0 %v1046
        %1203 = vmatpush.msra.mxu0 %v1045
        %1204 = vmatpush.msra.mxu0 %v1044
        %1205 = vmatpush.msra.mxu0 %v1043
        %1206 = vmatpush.msra.mxu0 %v1042
        %1207 = vmatmul.f32.gmra.mxu0 %v959
        %v1208 = vpop.f32.mrf.mxu0
        %v1209 = vadd.f32 %v1189, %v1208
        %1210 = vdwg.mxu0
        %1211 = vmatpush.msra.mxu0 %v1073
        %1212 = vmatpush.msra.mxu0 %v1072
        %1213 = vmatpush.msra.mxu0 %v1071
        %1214 = vmatpush.msra.mxu0 %v1070
        %1215 = vmatpush.msra.mxu0 %v1069
        %1216 = vmatpush.msra.mxu0 %v1068
        %1217 = vmatpush.msra.mxu0 %v1067
        %1218 = vmatpush.msra.mxu0 %v1066
        %1219 = vmatpush.msra.mxu0 %v1065
        %1220 = vmatpush.msra.mxu0 %v1064
        %1221 = vmatpush.msra.mxu0 %v1063
        %1222 = vmatpush.msra.mxu0 %v1062
        %1223 = vmatpush.msra.mxu0 %v1061
        %1224 = vmatpush.msra.mxu0 %v1060
        %1225 = vmatpush.msra.mxu0 %v1059
        %1226 = vmatpush.msra.mxu0 %v1058
        %1227 = vmatmul.f32.gmra.mxu0 %v960
        %v1228 = vpop.f32.mrf.mxu0
        %v1229 = vadd.f32 %v1209, %v1228
        %1230 = vdwg.mxu0
        %1231 = vmatpush.msra.mxu0 %v1089
        %1232 = vmatpush.msra.mxu0 %v1088
        %1233 = vmatpush.msra.mxu0 %v1087
        %1234 = vmatpush.msra.mxu0 %v1086
        %1235 = vmatpush.msra.mxu0 %v1085
        %1236 = vmatpush.msra.mxu0 %v1084
        %1237 = vmatpush.msra.mxu0 %v1083
        %1238 = vmatpush.msra.mxu0 %v1082
        %1239 = vmatpush.msra.mxu0 %v1081
        %1240 = vmatpush.msra.mxu0 %v1080
        %1241 = vmatpush.msra.mxu0 %v1079
        %1242 = vmatpush.msra.mxu0 %v1078
        %1243 = vmatpush.msra.mxu0 %v1077
        %1244 = vmatpush.msra.mxu0 %v1076
        %1245 = vmatpush.msra.mxu0 %v1075
        %1246 = vmatpush.msra.mxu0 %v1074
        %1247 = vmatmul.f32.gmra.mxu0 %v961
        %v1248 = vpop.f32.mrf.mxu0
        %v1249 = vadd.f32 %v1229, %v1248
        %1250 = vdwg.mxu0
        %v1251 = vxor.u32 %v1249, 2147483648
        %v1252 = vmul.f32 %v1251, 1.442695
        %v1253 = vpow.pop %v1252
        %v1254 = vadd.f32 %v1253, 1.0
        %v1255 = vrcp.pop %v1254
        %v1256 = vmul.f32 %v1254, %v1255
        %v1257 = vsub.f32 1.0, %v1256
        %v1258 = vmul.f32 %v1255, %v1257
        %v1259 = vadd.f32 %v1255, %v1258
        %vm1260 = vweird.f32 %v1254
        %vm1261 = vweird.f32 %v1255
        %vm1262 = vmor %vm1260, %vm1261
        %v1263 = vsel %vm1262, %v1255, %v1259
        %v1264 = vand.u32 2147483647, %v1254
        %vm1265 = vcmp.eq.f32.partialorder %v1264, 8.507059e+37
        %v1266 = vand.u32 %v1254, 2147483648
        %v1267 = vor.u32 1.1754944e-38, %v1266
        %v1268 = vsel %vm1265, %v1267, %v1263
        %v1269 = vmul.f32 1.0, %v1268
        %1270 = vst [vmem:[%s216] sm:$0x1] %v1269
        %s1271 = sand.u32 %s137, 1
        %s1272 = scalar_lea.sflag [#allocation3], %s1271
        %s1273 = sand.u32 %s137, 1
        %s1274 = scalar_lea.vmem [#allocation2], %s1273
        // Predicated region
        $region41: #{densenet121_vanilla_head.1} parent=39 // pred_check
          %p1275 = pneg %p147
        $region42: #{densenet121_vanilla_head.1} parent=39 // pred_check_branch
          %1277 = sbr.rel (%p1275) target = $region44
        $region43: #{densenet121_vanilla_head.1} parent=39 // pred_region
          %1279 = vsyncadd %s1272, 0
          %s1280 = scalar_lea.hbm %s5, %s19
          %s1282 = sshll.u32 %s1274, 4
          %s1283 = int_to_ptr.vmem [resolvable:$true] %s1282
          %s1284 = sshll.u32 %s1280, 4
          %s1285 = int_to_ptr.hbm [resolvable:$true] %s1284
          %1287 = dma.vmem_to_hbm [thread:$0]  %s1283, 16, %s1285, %s1272
        $region44: #{densenet121_vanilla_head.1} parent=39 // pred_fallthru
          _
      $region40: #{densenet121_vanilla_head.1} parent=5 // pred_fallthru
        _
      %p1288 = scmp.le.s32.totalorder 2, %s14
      // Predicated region
      $region45: #{densenet121_vanilla_head.1} parent=5 // pred_check
        %p1289 = pneg %p1288
      $region46: #{densenet121_vanilla_head.1} parent=5 // pred_check_branch
        %1291 = sbr.rel (%p1289) target = $region48
      $region47: #{densenet121_vanilla_head.1} parent=5 // pred_region
        %s1292 = ssub.s32 %s14, 2
        // Predicated region
        $region49: #{densenet121_vanilla_head.1} parent=47 // pred_check
          %p1293 = pneg %p153
        $region50: #{densenet121_vanilla_head.1} parent=47 // pred_check_branch
          %1295 = sbr.rel (%p1293) target = $region52
        $region51: #{densenet121_vanilla_head.1} parent=47 // pred_region
          %s1296 = sand.u32 %s138, 1
          %s1297 = scalar_lea.sflag [#allocation3], %s1296
          %s1298 = sand.u32 %s138, 1
          %s1299 = scalar_lea.vmem [#allocation2], %s1298
          %1301 = dma.done %s1297, 16
        $region52: #{densenet121_vanilla_head.1} parent=47 // pred_fallthru
          _
      $region48: #{densenet121_vanilla_head.1} parent=5 // pred_fallthru
        _
    $region6: #{densenet121_vanilla_head.1} parent=1 // loop_footer
      %s18 = sadd.s32 1, %s14
    $region7: #{densenet121_vanilla_head.1} parent=1 // loop_footer_branch
      %13 = sbr.rel target = $region3
    $region8: #{densenet121_vanilla_head.1} parent=1 // loop_exit
      _
    %1302 = vsyncpa [#allocation3], 1
    %s1303 = scalar_lea.sflag [#allocation3], 1
    %1304 = vsyncpa %s1303, 1

</llo_original>
